<compile_context>
chip_gen: v6e
topology: v6e:2x2x1
jax: 0.10.0
libtpu: 0.0.40
codegen_flags: <defaults>
</compile_context>

<pallas_src>
import jax
import jax.numpy as jnp
from jax.experimental import pallas as pl
from jax.experimental.pallas import tpu as pltpu


def _global_context_kernel(x_ref, wk_ref, w1t_ref, b1_ref, w2t_ref, b2_ref, o_ref):
    # x block: (Bt, C, L); weights are full (untiled) arrays.
    x = x_ref[...].astype(jnp.float32)                       # (Bt, C, L)
    wk = wk_ref[...].astype(jnp.float32)                     # (1, C)

    # ---- to_k: 1x1 Conv1d (dim_in -> 1) as VPU broadcast-mult + channel reduce ----
    # (bias omitted: softmax below is shift-invariant w.r.t. a per-batch scalar)
    ctx = jnp.sum(x * wk[:, :, None], axis=1)                # (Bt, L)

    # ---- softmax over the length dimension ----
    m = jnp.max(ctx, axis=-1, keepdims=True)
    e = jnp.exp(ctx - m)
    p = e * pl.reciprocal(jnp.sum(e, axis=-1, keepdims=True), approx=True)   # (Bt, L)

    # ---- einsum 'b i d, b j d -> b i j' (j == 1): VPU mult + lane reduce ----
    pooled = jnp.sum(x * p[:, None, :], axis=-1)             # (Bt, C)

    # ---- MLP: Conv1d(dim_in, inner, 1) -> SiLU -> Conv1d(inner, dim_out, 1) -> Sigmoid
    # batched over Bt rows (one well-shaped matmul per grid step instead of per sample)
    h = jnp.dot(pooled, w1t_ref[...].astype(jnp.float32),
                preferred_element_type=jnp.float32) + b1_ref[...]            # (Bt, inner)
    h = h * jax.nn.sigmoid(h)                                                # SiLU
    y = jnp.dot(h, w2t_ref[...].astype(jnp.float32),
                preferred_element_type=jnp.float32) + b2_ref[...]            # (Bt, dim_out)
    o_ref[0] = jax.nn.sigmoid(y).astype(o_ref.dtype)         # lane-dense (Bt, dim_out) store


def _choose_batch_tiling(B, C, L, *, vmem_budget_bytes=8 << 20):
    """Pick (Bt, n_steps). Keeps the double-buffered x slab under ~8 MiB so the default
    scoped-VMEM limit is respected on v5e (16 MiB) / v6e / v7x (32 MiB)."""
    bytes_per_row = max(1, C * L * 4)                    # f32 bytes per batch element
    cap = max(1, vmem_budget_bytes // (2 * bytes_per_row))   # 2x for double buffering
    if B <= cap and B < 16:
        # Tiny batch: one fat step (block dim == array dim, so tiling rules hold).
        return B, 1
    # Large batch: >= 2 steps so v7x megacore can shard the parallel batch axis;
    # sublane-aligned tile when possible.
    bt = min(cap, max(1, pl.cdiv(B, 2)))
    if bt >= 8:
        bt = (bt // 8) * 8
    return bt, pl.cdiv(B, bt)


def global_context(x, params):
    """x: (B, dim_in, L) float32 -> (B, dim_out, 1) float32 (matches the PyTorch module)."""
    B, C, L = x.shape
    wk, bk, w1, b1, w2, b2 = params
    del bk  # softmax shift-invariance: the to_k bias never changes the result
    inner = w1.shape[0]
    dim_out = w2.shape[0]

    bt, n_steps = _choose_batch_tiling(B, C, L)
    Bp = bt * n_steps
    xp = x if Bp == B else jnp.pad(x, ((0, Bp - B), (0, 0), (0, 0)))

    # Pre-transpose the 1x1-conv weights so the in-kernel matmuls are (Bt, K) @ (K, N).
    w1t = w1.T                              # (C, inner)
    w2t = w2.T                              # (inner, dim_out)
    b1r = b1.reshape(1, inner)              # (1, inner)
    b2r = b2.reshape(1, dim_out)            # (1, dim_out)

    full = lambda a: pl.BlockSpec(a.shape, lambda b: (0,) * a.ndim)

    out3 = pl.pallas_call(
        _global_context_kernel,
        out_shape=jax.ShapeDtypeStruct((n_steps, bt, dim_out), x.dtype),
        grid=(n_steps,),
        in_specs=[
            pl.BlockSpec((bt, C, L), lambda b: (b, 0, 0)),   # batch-blocked x slab
            full(wk),                                        # (1, C)
            full(w1t),                                       # (C, inner)
            full(b1r),                                       # (1, inner)
            full(w2t),                                       # (inner, dim_out)
            full(b2r),                                       # (1, dim_out)
        ],
        out_specs=pl.BlockSpec((1, bt, dim_out), lambda b: (b, 0, 0)),
        compiler_params=pltpu.CompilerParams(dimension_semantics=("parallel",)),
    )(xp, wk, w1t, b1r, w2t, b2r)

    out = out3.reshape(Bp, dim_out)[:B]
    return out.reshape(B, dim_out, 1)


def _reference(x, params):
    wk, bk, w1, b1, w2, b2 = params
    ctx = jnp.einsum("oc,bcl->bol", wk, x) + bk[None, :, :]             # (B, 1, L)
    p = jax.nn.softmax(ctx, axis=-1)
    out = jnp.einsum("bil,bjl->bij", x, p)                              # (B, C, 1)
    h = jnp.einsum("oc,bcl->bol", w1, out) + b1[None, :, :]
    h = jax.nn.silu(h)
    y = jnp.einsum("oc,bcl->bol", w2, h) + b2[None, :, :]
    return jax.nn.sigmoid(y)


if __name__ == "__main__":
    # Module config (matches GlobalContext(dim_in=4, dim_out=4, reduction=2, dim_min=8))
    dim_in, dim_out, reduction, dim_min = 4, 4, 2, 8
    inner_dim = max(dim_min, dim_out // reduction)
    B, L = 2, 16

    key = jax.random.PRNGKey(0)
    ks = jax.random.split(key, 7)
    x = jax.random.normal(ks[0], (B, dim_in, L), dtype=jnp.float32)

    # Deterministic parameter init (1x1 Conv1d weights squeezed to 2-D matrices).
    wk = jax.random.normal(ks[1], (1, dim_in), dtype=jnp.float32) * 0.2
    bk = jax.random.normal(ks[2], (1, 1), dtype=jnp.float32) * 0.1
    w1 = jax.random.normal(ks[3], (inner_dim, dim_in), dtype=jnp.float32) * 0.2
    b1 = jax.random.normal(ks[4], (inner_dim, 1), dtype=jnp.float32) * 0.1
    w2 = jax.random.normal(ks[5], (dim_out, inner_dim), dtype=jnp.float32) * 0.2
    b2 = jax.random.normal(ks[6], (dim_out, 1), dtype=jnp.float32) * 0.1
    params = (wk, bk, w1, b1, w2, b2)

    out = global_context(x, params)
    out = jax.block_until_ready(out)

    ref = _reference(x, params)
    assert out.shape == (B, dim_out, 1), out.shape
    # Tolerance relaxed slightly to accommodate the EUP approximate reciprocal in softmax.
    assert jnp.allclose(out, ref, atol=1e-3, rtol=1e-3), (out, ref)
    print("KERNEL_OK")
</pallas_src>

<mosaic_0001>
module attributes {stable_mosaic.version = 11 : i64} {
  func.func @_global_context_kernel(%arg0: i32, %arg1: memref<2x4x16xf32, #tpu.memory_space<vmem>>, %arg2: memref<1x4xf32, #tpu.memory_space<vmem>>, %arg3: memref<4x8xf32, #tpu.memory_space<vmem>>, %arg4: memref<1x8xf32, #tpu.memory_space<vmem>>, %arg5: memref<8x4xf32, #tpu.memory_space<vmem>>, %arg6: memref<1x4xf32, #tpu.memory_space<vmem>>, %arg7: memref<1x2x4xf32, #tpu.memory_space<vmem>>) attributes {dimension_semantics = [#tpu.dimension_semantics<parallel>], iteration_bounds = array<i64: 1>, scalar_prefetch = 0 : i64, scratch_operands = 0 : i64, tpu.core_type = #tpu.core_type<tc>, window_params = [{transform_indices = @transform_0, window_bounds = array<i64: 2, 4, 16>}, {pipeline_mode = #tpu.pipeline_mode<synchronous>, transform_indices = @transform_1, window_bounds = array<i64: 1, 4>}, {pipeline_mode = #tpu.pipeline_mode<synchronous>, transform_indices = @transform_2, window_bounds = array<i64: 4, 8>}, {pipeline_mode = #tpu.pipeline_mode<synchronous>, transform_indices = @transform_3, window_bounds = array<i64: 1, 8>}, {pipeline_mode = #tpu.pipeline_mode<synchronous>, transform_indices = @transform_4, window_bounds = array<i64: 8, 4>}, {pipeline_mode = #tpu.pipeline_mode<synchronous>, transform_indices = @transform_5, window_bounds = array<i64: 1, 4>}, {transform_indices = @transform_6, window_bounds = array<i64: 1, 2, 4>}]} {
    %c0 = arith.constant 0 : index
    %c0_0 = arith.constant 0 : index
    %c0_1 = arith.constant 0 : index
    %0 = vector.load %arg1[%c0, %c0_0, %c0_1] : memref<2x4x16xf32, #tpu.memory_space<vmem>>, vector<2x4x16xf32>
    %c0_2 = arith.constant 0 : index
    %c0_3 = arith.constant 0 : index
    %1 = vector.load %arg2[%c0_2, %c0_3] : memref<1x4xf32, #tpu.memory_space<vmem>>, vector<1x4xf32>
    %2 = vector.shape_cast %1 : vector<1x4xf32> to vector<1x4x1xf32>
    %3 = vector.broadcast %2 : vector<1x4x1xf32> to vector<2x4x16xf32>
    %4 = arith.mulf %0, %3 : vector<2x4x16xf32>
    %cst = arith.constant dense<0.000000e+00> : vector<2x16xf32>
    %5 = vector.multi_reduction <add>, %4, %cst [1] : vector<2x4x16xf32> to vector<2x16xf32>
    %cst_4 = arith.constant dense<0xFF800000> : vector<2xf32>
    %6 = vector.multi_reduction <maximumf>, %5, %cst_4 [1] : vector<2x16xf32> to vector<2xf32>
    %7 = vector.shape_cast %6 : vector<2xf32> to vector<2x1xf32>
    %8 = vector.broadcast %7 : vector<2x1xf32> to vector<2x16xf32>
    %9 = arith.subf %5, %8 : vector<2x16xf32>
    %10 = math.exp %9 : vector<2x16xf32>
    %cst_5 = arith.constant dense<0.000000e+00> : vector<2xf32>
    %11 = vector.multi_reduction <add>, %10, %cst_5 [1] : vector<2x16xf32> to vector<2xf32>
    %12 = vector.shape_cast %11 : vector<2xf32> to vector<2x1xf32>
    %13 = tpu.reciprocal %12 {approx = true} : vector<2x1xf32> -> vector<2x1xf32>
    %14 = vector.broadcast %13 : vector<2x1xf32> to vector<2x16xf32>
    %15 = arith.mulf %10, %14 : vector<2x16xf32>
    %16 = vector.shape_cast %15 : vector<2x16xf32> to vector<2x1x16xf32>
    %17 = vector.broadcast %16 : vector<2x1x16xf32> to vector<2x4x16xf32>
    %18 = arith.mulf %0, %17 : vector<2x4x16xf32>
    %cst_6 = arith.constant dense<0.000000e+00> : vector<2x4xf32>
    %19 = vector.multi_reduction <add>, %18, %cst_6 [2] : vector<2x4x16xf32> to vector<2x4xf32>
    %c0_7 = arith.constant 0 : index
    %c0_8 = arith.constant 0 : index
    %20 = vector.load %arg3[%c0_7, %c0_8] : memref<4x8xf32, #tpu.memory_space<vmem>>, vector<4x8xf32>
    %cst_9 = arith.constant dense<0.000000e+00> : vector<2x8xf32>
    %21 = tpu.matmul %19, %20, %cst_9 {dimension_numbers = #tpu.dot_dimension_numbers<[1], [0], [0], [1], [0, 0, 1, 1], [], []>} : vector<2x4xf32>, vector<4x8xf32>, vector<2x8xf32> -> vector<2x8xf32>
    %c0_10 = arith.constant 0 : index
    %c0_11 = arith.constant 0 : index
    %22 = vector.load %arg4[%c0_10, %c0_11] : memref<1x8xf32, #tpu.memory_space<vmem>>, vector<1x8xf32>
    %23 = vector.broadcast %22 : vector<1x8xf32> to vector<2x8xf32>
    %24 = arith.addf %21, %23 : vector<2x8xf32>
    %25 = arith.negf %24 : vector<2x8xf32>
    %26 = math.exp %25 : vector<2x8xf32>
    %cst_12 = arith.constant 1.000000e+00 : f32
    %27 = vector.broadcast %cst_12 : f32 to vector<2x8xf32>
    %28 = arith.addf %27, %26 : vector<2x8xf32>
    %29 = arith.divf %27, %28 : vector<2x8xf32>
    %30 = arith.mulf %24, %29 : vector<2x8xf32>
    %c0_13 = arith.constant 0 : index
    %c0_14 = arith.constant 0 : index
    %31 = vector.load %arg5[%c0_13, %c0_14] : memref<8x4xf32, #tpu.memory_space<vmem>>, vector<8x4xf32>
    %cst_15 = arith.constant dense<0.000000e+00> : vector<2x4xf32>
    %32 = tpu.matmul %30, %31, %cst_15 {dimension_numbers = #tpu.dot_dimension_numbers<[1], [0], [0], [1], [0, 0, 1, 1], [], []>} : vector<2x8xf32>, vector<8x4xf32>, vector<2x4xf32> -> vector<2x4xf32>
    %c0_16 = arith.constant 0 : index
    %c0_17 = arith.constant 0 : index
    %33 = vector.load %arg6[%c0_16, %c0_17] : memref<1x4xf32, #tpu.memory_space<vmem>>, vector<1x4xf32>
    %34 = vector.broadcast %33 : vector<1x4xf32> to vector<2x4xf32>
    %35 = arith.addf %32, %34 : vector<2x4xf32>
    %36 = arith.negf %35 : vector<2x4xf32>
    %37 = math.exp %36 : vector<2x4xf32>
    %cst_18 = arith.constant 1.000000e+00 : f32
    %38 = vector.broadcast %cst_18 : f32 to vector<2x4xf32>
    %39 = arith.addf %38, %37 : vector<2x4xf32>
    %40 = arith.divf %38, %39 : vector<2x4xf32>
    %c0_19 = arith.constant 0 : index
    %c0_20 = arith.constant 0 : index
    %c0_21 = arith.constant 0 : index
    %41 = vector.load %arg7[%c0_19, %c0_20, %c0_21] : memref<1x2x4xf32, #tpu.memory_space<vmem>>, vector<1x2x4xf32>
    %42 = vector.shape_cast %41 : vector<1x2x4xf32> to vector<2x4xf32>
    %43 = vector.shape_cast %40 : vector<2x4xf32> to vector<1x2x4xf32>
    tpu.vector_store %arg7[%c0_19, %c0_20, %c0_21], %43 {strides = array<i32>} : memref<1x2x4xf32, #tpu.memory_space<vmem>>, vector<1x2x4xf32>,
    return
  }
  func.func @transform_0(%arg0: i32) -> (i32, i32, i32) {
    %c0_i32 = arith.constant 0 : i32
    %c0_i32_0 = arith.constant 0 : i32
    %c0_i32_1 = arith.constant 0 : i32
    return %arg0, %c0_i32, %c0_i32_0 : i32, i32, i32
  }
  func.func @transform_1(%arg0: i32) -> (i32, i32) {
    %c0_i32 = arith.constant 0 : i32
    %c0_i32_0 = arith.constant 0 : i32
    %c0_i32_1 = arith.constant 0 : i32
    return %c0_i32, %c0_i32_0 : i32, i32
  }
  func.func @transform_2(%arg0: i32) -> (i32, i32) {
    %c0_i32 = arith.constant 0 : i32
    %c0_i32_0 = arith.constant 0 : i32
    %c0_i32_1 = arith.constant 0 : i32
    return %c0_i32, %c0_i32_0 : i32, i32
  }
  func.func @transform_3(%arg0: i32) -> (i32, i32) {
    %c0_i32 = arith.constant 0 : i32
    %c0_i32_0 = arith.constant 0 : i32
    %c0_i32_1 = arith.constant 0 : i32
    return %c0_i32, %c0_i32_0 : i32, i32
  }
  func.func @transform_4(%arg0: i32) -> (i32, i32) {
    %c0_i32 = arith.constant 0 : i32
    %c0_i32_0 = arith.constant 0 : i32
    %c0_i32_1 = arith.constant 0 : i32
    return %c0_i32, %c0_i32_0 : i32, i32
  }
  func.func @transform_5(%arg0: i32) -> (i32, i32) {
    %c0_i32 = arith.constant 0 : i32
    %c0_i32_0 = arith.constant 0 : i32
    %c0_i32_1 = arith.constant 0 : i32
    return %c0_i32, %c0_i32_0 : i32, i32
  }
  func.func @transform_6(%arg0: i32) -> (i32, i32, i32) {
    %c0_i32 = arith.constant 0 : i32
    %c0_i32_0 = arith.constant 0 : i32
    %c0_i32_1 = arith.constant 0 : i32
    return %arg0, %c0_i32, %c0_i32_0 : i32, i32, i32
  }
}

</mosaic_0001>

<llo_original>
// kernel: tpu_custom_call.1
$region0: #{tpu_custom_call.1}
  #allocation0 [shape = 'u32[]', space=smem, size = 0x4, offset = 0x4, fixed_abs, tag = 'smem constant byte address 0x4 - core index']
  #allocation1 [shape = 'u32[144,128]{1,0:T(1,128)}', space=vmem, size = 0x12000, scoped, tag = 'internal scratch']
  %s0 = inlined_call_operand.vmem [shape: f32[2,4,16], index: 0, kind: input, shape index: {}]
  %s1 = inlined_call_operand.vmem [shape: f32[1,4], index: 1, kind: input, shape index: {}]
  %s2 = inlined_call_operand.vmem [shape: f32[4,8], index: 2, kind: input, shape index: {}]
  %s3 = inlined_call_operand.vmem [shape: f32[1,8], index: 3, kind: input, shape index: {}]
  %s4 = inlined_call_operand.vmem [shape: f32[8,4], index: 4, kind: input, shape index: {}]
  %s5 = inlined_call_operand.vmem [shape: f32[1,4], index: 5, kind: input, shape index: {}]
  %s6 = inlined_call_operand.hbm [shape: f32[1,2,4], index: 6, kind: output, shape index: {}]
  %s7 = sld [smem:[#allocation0]]
  $region34: #{tpu_custom_call.1} parent=0
    _
  %s9 = ssub.s32 1, %s7
  %s10 = scalar_select 0, %s9, %s7
  $region1: #{tpu_custom_call.1} parent=0
    #allocation2 [shape = 'u8[1024]{0}', space=vmem, size = 0x400, scoped, tag = 'output window, operand 0, single buffered']
    #allocation3 [shape = 's32[1]{0}', space=sflag, size = 0x4, scoped, tag = 'scoped memory for tpu_custom_call.1']
    %11 = vsyncpa [#allocation3], 0
    // Predicated region
    $region2: #{tpu_custom_call.1} parent=1 // pred_check
      _
    $region3: #{tpu_custom_call.1} parent=1 // pred_check_branch
      %13 = sbr.rel (0) target = $region5
    $region4: #{tpu_custom_call.1} parent=1 // pred_region
      _
    $region5: #{tpu_custom_call.1} parent=1 // pred_fallthru
      _
    // Predicated region
    $region6: #{tpu_custom_call.1} parent=1 // pred_check
      _
    $region7: #{tpu_custom_call.1} parent=1 // pred_check_branch
      %15 = sbr.rel (0) target = $region9
    $region8: #{tpu_custom_call.1} parent=1 // pred_region
      _
    $region9: #{tpu_custom_call.1} parent=1 // pred_fallthru
      _
    // Predicated region
    $region10: #{tpu_custom_call.1} parent=1 // pred_check
      _
    $region11: #{tpu_custom_call.1} parent=1 // pred_check_branch
      %17 = sbr.rel (0) target = $region13
    $region12: #{tpu_custom_call.1} parent=1 // pred_region
      _
    $region13: #{tpu_custom_call.1} parent=1 // pred_fallthru
      _
    // Predicated region
    $region14: #{tpu_custom_call.1} parent=1 // pred_check
      _
    $region15: #{tpu_custom_call.1} parent=1 // pred_check_branch
      %19 = sbr.rel (0) target = $region17
    $region16: #{tpu_custom_call.1} parent=1 // pred_region
      _
    $region17: #{tpu_custom_call.1} parent=1 // pred_fallthru
      _
    // Predicated region
    $region18: #{tpu_custom_call.1} parent=1 // pred_check
      _
    $region19: #{tpu_custom_call.1} parent=1 // pred_check_branch
      %21 = sbr.rel (0) target = $region21
    $region20: #{tpu_custom_call.1} parent=1 // pred_region
      _
    $region21: #{tpu_custom_call.1} parent=1 // pred_fallthru
      _
    // Predicated region
    $region22: #{tpu_custom_call.1} parent=1 // pred_check
      _
    $region23: #{tpu_custom_call.1} parent=1 // pred_check_branch
      %23 = sbr.rel (0) target = $region25
    $region24: #{tpu_custom_call.1} parent=1 // pred_region
      _
    $region25: #{tpu_custom_call.1} parent=1 // pred_fallthru
      _
    %v24 = vld [vmem:[%s0] sm:$0xf]
    %v25 = vld [vmem:[%s0 + $0x4] sm:$0xf]
    %v26 = vld [vmem:[%s1] sm:$0x1]
    %v27 = vlaneseq
    %v28 = vshrl.u32 %v27, 7
    %v29 = vsub.s32 0, %v28
    %v30 = vrot.slane %v26, %v29
    %32 = vbcast.lane.b32.xlu0 %v30, 256
    %v33 = vpop.permute.xlu0 %32
    %v34 = vmul.f32 %v24, %v33
    %v35 = vmul.f32 %v25, %v33
    %vm36 = vcmask 125952
    %v37 = vsel %vm36, %v34, 0.0
    %v38 = vrot.slane %v37, 4
    %v39 = vadd.f32 %v37, %v38
    %v40 = vrot.slane %v39, 2
    %v41 = vadd.f32 %v39, %v40
    %v42 = vrot.slane %v41, 1
    %v43 = vadd.f32 %v41, %v42
    %v44 = vsel %vm36, %v35, 0.0
    %v45 = vrot.slane %v44, 4
    %v46 = vadd.f32 %v44, %v45
    %v47 = vrot.slane %v46, 2
    %v48 = vadd.f32 %v46, %v47
    %v49 = vrot.slane %v48, 1
    %v50 = vadd.f32 %v48, %v49
    %vm53 = vcmask 1041409
    %v54 = vsel %vm53, %v50, %v43
    %vm56 = vcmask 123904
    %v57 = vsel %vm56, %v54, -inf
    %58 = vmax.xlane.f32.xlu0 %v57
    %v59 = vpop.xlane.xlu0 %58
    %v61 = vrot.slane %v59, 1
    %v64 = vsub.f32 %v43, %v59
    %v65 = vsub.f32 %v50, %v61
    %v66 = vmul.f32 %v64, 1.442695
    %v67 = vpow.pop %v66
    %v68 = vmul.f32 %v65, 1.442695
    %v69 = vpow.pop %v68
    %v72 = vrot.slane %v69, 7
    %v73 = vsel %vm53, %v72, %v67
    %v75 = vsel %vm56, %v73, 0.0
    %76 = vadd.xlane.f32.xlu0 %v75
    %v77 = vpop.xlane.xlu0 %76
    %v78 = vrcp.pop %v77
    %v80 = vrot.slane %v78, 1
    %v83 = vmul.f32 %v67, %v78
    %v84 = vmul.f32 %v69, %v80
    %v85 = vlaneseq
    %v86 = vshrl.u32 %v85, 7
    %v87 = vsub.s32 0, %v86
    %v88 = vrot.slane %v83, %v87
    %v89 = vlaneseq
    %v90 = vshrl.u32 %v89, 7
    %v91 = vsub.s32 0, %v90
    %v92 = vrot.slane %v84, %v91
    %v93 = vmul.f32 %v24, %v88
    %v94 = vmul.f32 %v25, %v92
    %v95 = vsel %vm36, %v93, 0.0
    %96 = vadd.xlane.f32.xlu0 %v95
    %v97 = vpop.xlane.xlu0 %96
    %v98 = vsel %vm36, %v94, 0.0
    %99 = vadd.xlane.f32.xlu0 %v98
    %v100 = vpop.xlane.xlu0 %99
    %v101 = vld [vmem:[%s2] sm:$0xf]
    %v102 = vld [vmem:[%s3] sm:$0x1]
    %v104 = vlaneseq
    %v105 = vshrl.u32 %v104, 7
    %v106 = vsub.s32 0, %v105
    %v107 = vrot.slane %v102, %v106
    %v111 = vlaneseq
    %v112 = vand.u32 %v111, 127
    %v113 = vlaneseq
    %v114 = vshrl.u32 %v113, 7
    %v115 = vsub.s32 %v112, %v114
    %v116 = vrot.slane %v97, %v115
    %v117 = vlaneseq
    %v118 = vshrl.u32 %v117, 7
    %v119 = vsub.s32 %v112, %v118
    %v120 = vrot.slane %v100, %v119
    %v121 = vsel %vm53, %v120, %v116
    %vm122 = vcmask 31744
    %v123 = vsel %vm122, %v121, 0
    %vm125 = vcmask 1043456
    %v127 = vsel %vm125, %v101, 0
    %129 = vmatprep.subr.mxu0 0.0
    %130 = vmatpush1.msra.mxu0 0.0
    %131 = vmatprep.subr.mxu0 0.0
    %132 = vmatpush1.msra.mxu0 0.0
    %133 = vmatprep.subr.mxu0 0.0
    %134 = vmatpush1.msra.mxu0 0.0
    %135 = vmatprep.subr.mxu0 0.0
    %136 = vmatpush1.msra.mxu0 0.0
    %137 = vmatprep.subr.mxu0 0.0
    %138 = vmatpush1.msra.mxu0 0.0
    %139 = vmatprep.subr.mxu0 0.0
    %140 = vmatpush1.msra.mxu0 0.0
    %141 = vmatprep.subr.mxu0 0.0
    %142 = vmatpush1.msra.mxu0 0.0
    %143 = vmatprep.subr.mxu0 0.0
    %144 = vmatpush1.msra.mxu0 0.0
    %145 = vmatprep.subr.mxu0 0.0
    %146 = vmatpush1.msra.mxu0 0.0
    %147 = vmatprep.subr.mxu0 0.0
    %148 = vmatpush1.msra.mxu0 0.0
    %149 = vmatprep.subr.mxu0 0.0
    %150 = vmatpush1.msra.mxu0 0.0
    %151 = vmatprep.subr.mxu0 0.0
    %152 = vmatpush1.msra.mxu0 0.0
    %153 = vmatprep.subr.mxu0 0.0
    %154 = vmatpush1.msra.mxu0 0.0
    %155 = vmatprep.subr.mxu0 0.0
    %156 = vmatpush1.msra.mxu0 0.0
    %157 = vmatprep.subr.mxu0 0.0
    %158 = vmatpush1.msra.mxu0 0.0
    %159 = vmatprep.subr.mxu0 0.0
    %160 = vmatpush1.msra.mxu0 %v127
    %161 = vmatprep.subr.mxu0 0.0
    %162 = vmatpush2.msra.mxu0 0.0
    %163 = vmatprep.subr.mxu0 0.0
    %164 = vmatpush2.msra.mxu0 0.0
    %165 = vmatprep.subr.mxu0 0.0
    %166 = vmatpush2.msra.mxu0 0.0
    %167 = vmatprep.subr.mxu0 0.0
    %168 = vmatpush2.msra.mxu0 0.0
    %169 = vmatprep.subr.mxu0 0.0
    %170 = vmatpush2.msra.mxu0 0.0
    %171 = vmatprep.subr.mxu0 0.0
    %172 = vmatpush2.msra.mxu0 0.0
    %173 = vmatprep.subr.mxu0 0.0
    %174 = vmatpush2.msra.mxu0 0.0
    %175 = vmatprep.subr.mxu0 0.0
    %176 = vmatpush2.msra.mxu0 0.0
    %177 = vmatprep.subr.mxu0 0.0
    %178 = vmatpush2.msra.mxu0 0.0
    %179 = vmatprep.subr.mxu0 0.0
    %180 = vmatpush2.msra.mxu0 0.0
    %181 = vmatprep.subr.mxu0 0.0
    %182 = vmatpush2.msra.mxu0 0.0
    %183 = vmatprep.subr.mxu0 0.0
    %184 = vmatpush2.msra.mxu0 0.0
    %185 = vmatprep.subr.mxu0 0.0
    %186 = vmatpush2.msra.mxu0 0.0
    %187 = vmatprep.subr.mxu0 0.0
    %188 = vmatpush2.msra.mxu0 0.0
    %189 = vmatprep.subr.mxu0 0.0
    %190 = vmatpush2.msra.mxu0 0.0
    %191 = vmatprep.subr.mxu0 0.0
    %192 = vmatpush2.msra.mxu0 0.0
    %193 = vmatprep.mubr.f32.mxu0 0.0
    %194 = vmatmul.mubr.f32.gmra.mxu0 %v123
    %v195 = vpop.f32.mrf.mxu0
    %v196 = vadd.f32 %v107, %v195
    %v197 = vpop.f32.mrf.mxu0
    %198 = vdwg.mxu0
    %v199 = vxor.u32 %v196, 2147483648
    %v200 = vmul.f32 %v199, 1.442695
    %v201 = vpow.pop %v200
    %v202 = vadd.f32 %v201, 1.0
    %v203 = vrcp.pop %v202
    %v204 = vmul.f32 1.0, %v203
    %v205 = vmul.f32 %v196, %v204
    %v206 = vld [vmem:[%s4] sm:$0xff]
    %v207 = vld [vmem:[%s5] sm:$0x1]
    %v209 = vlaneseq
    %v210 = vshrl.u32 %v209, 7
    %v211 = vsub.s32 0, %v210
    %v212 = vrot.slane %v207, %v211
    %vm214 = vcmask 64512
    %v216 = vsel %vm214, %v205, 0
    %218 = vmatprep.subr.mxu0 0.0
    %219 = vmatpush1.msra.mxu0 0.0
    %220 = vmatprep.subr.mxu0 0.0
    %221 = vmatpush1.msra.mxu0 0.0
    %222 = vmatprep.subr.mxu0 0.0
    %223 = vmatpush1.msra.mxu0 0.0
    %224 = vmatprep.subr.mxu0 0.0
    %225 = vmatpush1.msra.mxu0 0.0
    %226 = vmatprep.subr.mxu0 0.0
    %227 = vmatpush1.msra.mxu0 0.0
    %228 = vmatprep.subr.mxu0 0.0
    %229 = vmatpush1.msra.mxu0 0.0
    %230 = vmatprep.subr.mxu0 0.0
    %231 = vmatpush1.msra.mxu0 0.0
    %232 = vmatprep.subr.mxu0 0.0
    %233 = vmatpush1.msra.mxu0 0.0
    %234 = vmatprep.subr.mxu0 0.0
    %235 = vmatpush1.msra.mxu0 0.0
    %236 = vmatprep.subr.mxu0 0.0
    %237 = vmatpush1.msra.mxu0 0.0
    %238 = vmatprep.subr.mxu0 0.0
    %239 = vmatpush1.msra.mxu0 0.0
    %240 = vmatprep.subr.mxu0 0.0
    %241 = vmatpush1.msra.mxu0 0.0
    %242 = vmatprep.subr.mxu0 0.0
    %243 = vmatpush1.msra.mxu0 0.0
    %244 = vmatprep.subr.mxu0 0.0
    %245 = vmatpush1.msra.mxu0 0.0
    %246 = vmatprep.subr.mxu0 0.0
    %247 = vmatpush1.msra.mxu0 0.0
    %248 = vmatprep.subr.mxu0 0.0
    %249 = vmatpush1.msra.mxu0 %v206
    %250 = vmatprep.subr.mxu0 0.0
    %251 = vmatpush2.msra.mxu0 0.0
    %252 = vmatprep.subr.mxu0 0.0
    %253 = vmatpush2.msra.mxu0 0.0
    %254 = vmatprep.subr.mxu0 0.0
    %255 = vmatpush2.msra.mxu0 0.0
    %256 = vmatprep.subr.mxu0 0.0
    %257 = vmatpush2.msra.mxu0 0.0
    %258 = vmatprep.subr.mxu0 0.0
    %259 = vmatpush2.msra.mxu0 0.0
    %260 = vmatprep.subr.mxu0 0.0
    %261 = vmatpush2.msra.mxu0 0.0
    %262 = vmatprep.subr.mxu0 0.0
    %263 = vmatpush2.msra.mxu0 0.0
    %264 = vmatprep.subr.mxu0 0.0
    %265 = vmatpush2.msra.mxu0 0.0
    %266 = vmatprep.subr.mxu0 0.0
    %267 = vmatpush2.msra.mxu0 0.0
    %268 = vmatprep.subr.mxu0 0.0
    %269 = vmatpush2.msra.mxu0 0.0
    %270 = vmatprep.subr.mxu0 0.0
    %271 = vmatpush2.msra.mxu0 0.0
    %272 = vmatprep.subr.mxu0 0.0
    %273 = vmatpush2.msra.mxu0 0.0
    %274 = vmatprep.subr.mxu0 0.0
    %275 = vmatpush2.msra.mxu0 0.0
    %276 = vmatprep.subr.mxu0 0.0
    %277 = vmatpush2.msra.mxu0 0.0
    %278 = vmatprep.subr.mxu0 0.0
    %279 = vmatpush2.msra.mxu0 0.0
    %280 = vmatprep.subr.mxu0 0.0
    %281 = vmatpush2.msra.mxu0 0.0
    %282 = vmatprep.mubr.f32.mxu0 0.0
    %283 = vmatmul.mubr.f32.gmra.mxu0 %v216
    %v284 = vpop.f32.mrf.mxu0
    %v285 = vadd.f32 %v212, %v284
    %v286 = vpop.f32.mrf.mxu0
    %287 = vdwg.mxu0
    %v288 = vxor.u32 %v285, 2147483648
    %v289 = vmul.f32 %v288, 1.442695
    %v290 = vpow.pop %v289
    %v291 = vadd.f32 %v290, 1.0
    %v292 = vrcp.pop %v291
    %v293 = vmul.f32 1.0, %v292
    %vm294 = vcmask 25600
    %295 = vst.msk [vmem:[#allocation2] sm:$0x3] %vm294, %v293
    // Predicated region
    $region26: #{tpu_custom_call.1} parent=1 // pred_check
      _
    $region27: #{tpu_custom_call.1} parent=1 // pred_check_branch
      %297 = sbr.rel (0) target = $region29
    $region28: #{tpu_custom_call.1} parent=1 // pred_region
      %s299 = ssub.s32 32, 32
      %300 = vsyncadd [#allocation3], %s299
      %s302 = sshll.u32 [#allocation2], 4
      %s303 = int_to_ptr.vmem [resolvable:$true] %s302
      %305 = dma.vmem_to_hbm [thread:$0]  %s303, 32, %s6, [#allocation3]
    $region29: #{tpu_custom_call.1} parent=1 // pred_fallthru
      _
    // Predicated region
    $region30: #{tpu_custom_call.1} parent=1 // pred_check
      _
    $region31: #{tpu_custom_call.1} parent=1 // pred_check_branch
      %307 = sbr.rel (0) target = $region33
    $region32: #{tpu_custom_call.1} parent=1 // pred_region
      %308 = dma.done [#allocation3], 32
    $region33: #{tpu_custom_call.1} parent=1 // pred_fallthru
      _
    %309 = vsyncpa [#allocation3], 1

</llo_original>
